<compile_context>
chip_gen: v5e
topology: v5e:2x2
jax: 0.10.0
libtpu: 0.0.40
codegen_flags: <defaults>
</compile_context>

<pallas_src>
import jax
import jax.numpy as jnp
from jax.experimental import pallas as pl
from jax.experimental.pallas import tpu as pltpu


def _cdiv(a, b):
    return -(-a // b)


def _round_up(x, m):
    return ((x + m - 1) // m) * m


def _tpu_generation():
    """Best-effort TPU generation from the device kind string (0 = unknown)."""
    try:
        kind = jax.devices()[0].device_kind.lower()
    except Exception:
        return 0
    if "v7" in kind or "tpu7" in kind or "7x" in kind:
        return 7
    for g in (6, 5, 4):
        if f"v{g}" in kind:
            return g
    return 0


# Dimension-semantics constants (string fallback keeps older jax working).
_CORE_PARALLEL = getattr(pltpu, "CORE_PARALLEL", "parallel")
_ARBITRARY = getattr(pltpu, "ARBITRARY", "arbitrary")


# ----------------------------------------------------------------------------
# Pallas kernel: masked cross-entropy accumulation over row tiles.
#   logits_ref : [TM, C]   any float dtype; softmax math in f32
#   tgt_ref    : [TM, 1]   int32 class index, or -1 => ignore row
#   sum_ref    : [1, 1, 1] per-core NLL sum (written on the last inner step)
#   acc_loss   : [TM, 1]   f32 resident per-row accumulator (VMEM scratch)
# ----------------------------------------------------------------------------
def _masked_ce_kernel(logits_ref, tgt_ref, sum_ref, acc_loss):
    i = pl.program_id(1)

    @pl.when(i == 0)
    def _():
        acc_loss[...] = jnp.zeros_like(acc_loss)

    logits = logits_ref[...].astype(jnp.float32)                    # [TM, C]
    tgt = tgt_ref[...]                                              # [TM, 1]
    valid = tgt >= 0                                                # [TM, 1]

    # Stable CE directly on the shifted logits: the per-row max cancels, so no
    # extra [TM,1] +/-m fixups are needed.
    m = jnp.max(logits, axis=-1, keepdims=True)                     # [TM, 1]
    shifted = logits - m                                            # [TM, C]
    lse_s = jnp.log(jnp.sum(jnp.exp(shifted), axis=-1, keepdims=True))
    col = jax.lax.broadcasted_iota(jnp.int32, shifted.shape, 1)     # [TM, C]
    tgt_s = jnp.sum(jnp.where(col == tgt, shifted, 0.0),
                    axis=-1, keepdims=True)                         # [TM, 1]

    # where-masking (not multiplication) so garbage rows in ragged / padded
    # edge blocks can never leak NaN/Inf into the accumulator.
    acc_loss[...] += jnp.where(valid, lse_s - tgt_s, 0.0)

    @pl.when(i == pl.num_programs(1) - 1)
    def _():
        sum_ref[...] = jnp.sum(acc_loss[...]).reshape(1, 1, 1)


def masked_cross_entropy_sum(logits, targets_enc, *, block_rows=None):
    """Sum of NLL over valid rows (target >= 0).

    logits:      [N, C] float (f32 / bf16 fed as-is; softmax math in f32)
    targets_enc: [N] int32 class index, or -1 for rows to ignore.
    block_rows:  optional row-tile override (testing / tuning).
    """
    N, C = logits.shape
    itemsize = jnp.dtype(logits.dtype).itemsize
    gen = _tpu_generation()

    # --- per-generation plan -------------------------------------------------
    num_cores = 2 if gen >= 7 else 1               # 2 TensorCores only on v7x
    try:
        vmem_cap = int(pltpu.get_tpu_info().vmem_capacity_bytes)
    except Exception:
        vmem_cap = (64 if gen >= 7 else 128) * 1024 * 1024
    # Scoped limit: leave headroom below physical; 96 MiB cap on 128 MiB chips,
    # 48 MiB on v7x's 64 MiB/TC.
    vmem_limit = min(max(vmem_cap - 16 * 1024 * 1024, 32 * 1024 * 1024),
                     96 * 1024 * 1024)
    work_budget = (vmem_limit * 2) // 3            # working-set target
    target_block_bytes = 8 * 1024 * 1024           # HBM bytes of logits / block

    # --- row-tile sizing (bytes-targeted, dtype- and lane-padding-aware) -----
    c_vmem = _round_up(C, 128)                     # lane-padded cols in VMEM
    per_row_vmem = (2 * c_vmem * itemsize          # double-buffered logits
                    + 3 * c_vmem * 4               # in-kernel f32 temporaries
                    + 2 * 512                      # double-buffered (tm,1) tgt
                    + 512)                         # (tm,1) f32 accumulator
    rows_by_vmem = max(16, work_budget // per_row_vmem)
    rows_by_hbm = max(16, target_block_bytes // max(1, C * itemsize))
    tm = min(rows_by_vmem, rows_by_hbm)
    tm = min(tm, _round_up(_cdiv(N, num_cores), 16))   # no bigger than needed
    tm = max(16, (tm // 16) * 16)
    if block_rows is not None:
        tm = max(16, (min(int(block_rows), tm) // 16) * 16)

    # --- grid: make the block count a multiple of num_cores ------------------
    nb_real = _cdiv(N, tm)
    if num_cores > 1 and nb_real < num_cores:
        num_cores = 1                              # not enough work to split
    nb_grid = _round_up(nb_real, num_cores)
    if nb_grid != nb_real:
        tm_try = max(16, _round_up(_cdiv(N, nb_grid), 16))
        if _cdiv(N, tm_try) == nb_grid:            # re-derive tile: no phantoms
            tm, nb_real = tm_try, nb_grid
    nbc = nb_grid // num_cores

    # Only the tiny target vector gets padded; the logits are never rewritten.
    tgt = targets_enc.astype(jnp.int32)
    pad_rows = nb_grid * tm - N
    if pad_rows > 0:
        tgt = jnp.pad(tgt, ((0, pad_rows),), constant_values=-1)
    tgt2 = tgt.reshape(nb_grid * tm, 1)

    if nb_grid == nb_real:
        logits_index = lambda c, i: (c * nbc + i, 0)
    else:
        # Rare tiny-N fallback: clamp phantom blocks onto the last real block;
        # their targets are all -1 so they contribute nothing.
        last = nb_real - 1
        logits_index = lambda c, i: (jnp.minimum(c * nbc + i, last), 0)
    tgt_index = lambda c, i: (c * nbc + i, 0)

    if num_cores > 1:
        dim_sem = (_CORE_PARALLEL, _ARBITRARY)     # real 2-TC split on v7x
    else:
        dim_sem = (_ARBITRARY, _ARBITRARY)

    cost = pl.CostEstimate(
        flops=int(5 * N * C),
        transcendentals=int(N * C),
        bytes_accessed=int(N * C * itemsize + nb_grid * tm * 4 + num_cores * 4))

    sums = pl.pallas_call(
        _masked_ce_kernel,
        out_shape=jax.ShapeDtypeStruct((num_cores, 1, 1), jnp.float32),
        grid_spec=pltpu.PrefetchScalarGridSpec(
            num_scalar_prefetch=0,
            grid=(num_cores, nbc),
            in_specs=[pl.BlockSpec((tm, C), logits_index),
                      pl.BlockSpec((tm, 1), tgt_index)],
            out_specs=pl.BlockSpec((1, 1, 1), lambda c, i: (c, 0, 0)),
            scratch_shapes=[pltpu.VMEM((tm, 1), jnp.float32)]),
        compiler_params=pltpu.CompilerParams(
            dimension_semantics=dim_sem,
            vmem_limit_bytes=int(vmem_limit)),
        cost_estimate=cost,
    )(logits, tgt2)

    return jnp.sum(sums)


# ----------------------------------------------------------------------------
# AlignerLoss.forward equivalent
# ----------------------------------------------------------------------------
def aligner_loss(inputs, predictions):
    con_targets = inputs[-4]
    (con_predictions, src_masks, con_masks, _, _, tv_attn,
     diagonal_loss) = predictions
    del src_masks, tv_attn  # unused by the loss (matches PyTorch forward)

    # PyTorch: con_masks = ~con_masks (valid = ~pad); truncation to the common
    # time length is expressed through the target encoding instead of slicing
    # the (large) logits array.
    B, Tp, C = con_predictions.shape
    Tm = con_masks.shape[1]
    Tmin = min(Tp, Tm)

    valid = jnp.logical_not(con_masks[:, :Tmin])                     # [B, Tmin]

    # TODO(synk): 3-D soft-probability con_targets (prob-target CrossEntropy)
    # not supported here; class-index targets assumed.
    tgt = con_targets[:, :Tmin].astype(jnp.int32)                    # [B, Tmin]
    enc = jnp.where(valid, tgt, -1)                                  # -1 => ignore
    if Tp > Tmin:
        # rows t in [Tmin, Tp) of the predictions are ignored via target=-1
        enc = jnp.pad(enc, ((0, 0), (0, Tp - Tmin)), constant_values=-1)

    logits2 = con_predictions.reshape(B * Tp, C)   # free reshape, no HBM copy
    enc1 = enc.reshape(B * Tp)

    loss_sum = masked_cross_entropy_sum(logits2, enc1)
    # Exact integer count over the tiny mask; no second kernel output needed.
    valid_cnt = jnp.count_nonzero(valid).astype(jnp.float32)
    # Note: if every position is masked, valid_cnt==0 and this is NaN, same as
    # the PyTorch reference (CrossEntropyLoss over an empty selection).
    con_loss = loss_sum / valid_cnt
    total_loss = con_loss + diagonal_loss
    return total_loss, con_loss, diagonal_loss


# ----------------------------------------------------------------------------
# Pure-JAX references for correctness
# ----------------------------------------------------------------------------
def _ref_masked_nll(logits, targets, valid):
    logp = jax.nn.log_softmax(logits.astype(jnp.float32), axis=-1)
    nll = -jnp.take_along_axis(logp, targets[:, None].astype(jnp.int32),
                               axis=-1)[:, 0]
    return nll * valid.astype(jnp.float32)


if __name__ == "__main__":
    key = jax.random.PRNGKey(0)
    k1, k2, k3 = jax.random.split(key, 3)

    B, T_pred, T_tgt, C = 2, 72, 64, 32   # exercises the truncation branch

    con_predictions = jax.random.normal(k1, (B, T_pred, C), dtype=jnp.float32)
    con_targets = jax.random.randint(k2, (B, T_tgt), 0, C, dtype=jnp.int32)

    lengths = jnp.array([50, 64], dtype=jnp.int32)
    t_idx = jnp.arange(T_tgt)[None, :]
    con_masks = t_idx >= lengths[:, None]            # True = padded
    src_masks = jnp.zeros((B, 8), dtype=bool)        # unused by the loss
    tv_attn = jax.random.normal(k3, (B, 8, T_tgt), dtype=jnp.float32)
    diagonal_loss = jnp.float32(0.123)

    inputs = (con_targets, None, None, None)
    predictions = (con_predictions, src_masks, con_masks, None, None,
                   tv_attn, diagonal_loss)

    total, con_loss, diag = aligner_loss(inputs, predictions)
    jax.block_until_ready((total, con_loss, diag))

    # reference check (end-to-end)
    cp = con_predictions[:, :T_tgt, :].reshape(B * T_tgt, C)
    ct = con_targets.reshape(B * T_tgt)
    vm = jnp.logical_not(con_masks).reshape(B * T_tgt)
    nll_ref = _ref_masked_nll(cp, ct, vm)
    ref_con = jnp.sum(nll_ref) / jnp.sum(vm.astype(jnp.float32))
    ref_total = ref_con + diagonal_loss
    assert jnp.allclose(con_loss, ref_con, rtol=1e-5, atol=1e-4), (con_loss, ref_con)
    assert jnp.allclose(total, ref_total, rtol=1e-5, atol=1e-4), (total, ref_total)

    # extra check: ragged row blocks (N=144 not divisible by 32) exercise the
    # where-masked padded-edge path inside the kernel.
    enc_flat = jnp.where(vm, ct, -1)
    s_small = masked_cross_entropy_sum(cp, enc_flat, block_rows=32)
    jax.block_until_ready(s_small)
    ref_sum = jnp.sum(nll_ref)
    assert jnp.allclose(s_small, ref_sum, rtol=1e-5, atol=1e-3), (s_small, ref_sum)

    print("KERNEL_OK")
</pallas_src>

<mosaic_0001>
module attributes {stable_mosaic.version = 11 : i64} {
  func.func @_masked_ce_kernel(%arg0: i32, %arg1: i32, %arg2: memref<144x32xf32, #tpu.memory_space<vmem>>, %arg3: memref<144x1xi32, #tpu.memory_space<vmem>>, %arg4: memref<1x1x1xf32, #tpu.memory_space<vmem>>, %arg5: memref<144x1xf32, #tpu.memory_space<vmem>>) attributes {dimension_semantics = [#tpu.dimension_semantics<arbitrary>, #tpu.dimension_semantics<arbitrary>], iteration_bounds = array<i64: 1, 1>, scalar_prefetch = 0 : i64, scratch_operands = 1 : i64, tpu.core_type = #tpu.core_type<tc>, window_params = [{transform_indices = @transform_0, window_bounds = array<i64: 144, 32>}, {transform_indices = @transform_1, window_bounds = array<i64: 144, 1>}, {transform_indices = @transform_2, window_bounds = array<i64: 1, 1, 1>}]} {
    %c0_i32 = arith.constant 0 : i32
    %0 = arith.cmpi eq, %arg1, %c0_i32 : i32
    %1 = arith.extui %0 : i1 to i32
    %c0_i32_0 = arith.constant 0 : i32
    %2 = arith.cmpi ne, %1, %c0_i32_0 : i32
    scf.if %2 {
      %cst_15 = arith.constant 0.000000e+00 : f32
      %31 = vector.broadcast %cst_15 : f32 to vector<144x1xf32>
      %c0_16 = arith.constant 0 : index
      %c0_17 = arith.constant 0 : index
      %32 = vector.load %arg5[%c0_16, %c0_17] : memref<144x1xf32, #tpu.memory_space<vmem>>, vector<144x1xf32>
      tpu.vector_store %arg5[%c0_16, %c0_17], %31 {strides = array<i32>} : memref<144x1xf32, #tpu.memory_space<vmem>>, vector<144x1xf32>,
    } else {
    }
    %c0 = arith.constant 0 : index
    %c0_1 = arith.constant 0 : index
    %3 = vector.load %arg2[%c0, %c0_1] : memref<144x32xf32, #tpu.memory_space<vmem>>, vector<144x32xf32>
    %c0_2 = arith.constant 0 : index
    %c0_3 = arith.constant 0 : index
    %4 = vector.load %arg3[%c0_2, %c0_3] : memref<144x1xi32, #tpu.memory_space<vmem>>, vector<144x1xi32>
    %c0_i32_4 = arith.constant 0 : i32
    %5 = vector.broadcast %c0_i32_4 : i32 to vector<144x1xi32>
    %6 = arith.cmpi sge, %4, %5 : vector<144x1xi32>
    %cst = arith.constant dense<0xFF800000> : vector<144xf32>
    %7 = vector.multi_reduction <maximumf>, %3, %cst [1] : vector<144x32xf32> to vector<144xf32>
    %8 = vector.shape_cast %7 : vector<144xf32> to vector<144x1xf32>
    %9 = vector.broadcast %8 : vector<144x1xf32> to vector<144x32xf32>
    %10 = arith.subf %3, %9 : vector<144x32xf32>
    %11 = math.exp %10 : vector<144x32xf32>
    %cst_5 = arith.constant dense<0.000000e+00> : vector<144xf32>
    %12 = vector.multi_reduction <add>, %11, %cst_5 [1] : vector<144x32xf32> to vector<144xf32>
    %13 = vector.shape_cast %12 : vector<144xf32> to vector<144x1xf32>
    %14 = math.log %13 : vector<144x1xf32>
    %15 = tpu.iota {dimensions = array<i32: 1>} : vector<144x32xi32>
    %16 = vector.broadcast %4 : vector<144x1xi32> to vector<144x32xi32>
    %17 = arith.cmpi eq, %15, %16 : vector<144x32xi32>
    %cst_6 = arith.constant 0.000000e+00 : f32
    %18 = vector.broadcast %cst_6 : f32 to vector<144x32xf32>
    %19 = arith.select %17, %10, %18 : vector<144x32xi1>, vector<144x32xf32>
    %cst_7 = arith.constant dense<0.000000e+00> : vector<144xf32>
    %20 = vector.multi_reduction <add>, %19, %cst_7 [1] : vector<144x32xf32> to vector<144xf32>
    %21 = vector.shape_cast %20 : vector<144xf32> to vector<144x1xf32>
    %c0_8 = arith.constant 0 : index
    %c0_9 = arith.constant 0 : index
    %22 = vector.load %arg5[%c0_8, %c0_9] : memref<144x1xf32, #tpu.memory_space<vmem>>, vector<144x1xf32>
    %23 = arith.subf %14, %21 : vector<144x1xf32>
    %cst_10 = arith.constant 0.000000e+00 : f32
    %24 = vector.broadcast %cst_10 : f32 to vector<144x1xf32>
    %25 = arith.select %6, %23, %24 : vector<144x1xi1>, vector<144x1xf32>
    %26 = arith.addf %22, %25 : vector<144x1xf32>
    %c0_11 = arith.constant 0 : index
    %c0_12 = arith.constant 0 : index
    %27 = vector.load %arg5[%c0_11, %c0_12] : memref<144x1xf32, #tpu.memory_space<vmem>>, vector<144x1xf32>
    tpu.vector_store %arg5[%c0_11, %c0_12], %26 {strides = array<i32>} : memref<144x1xf32, #tpu.memory_space<vmem>>, vector<144x1xf32>,
    %c0_i32_13 = arith.constant 0 : i32
    %28 = arith.cmpi eq, %arg1, %c0_i32_13 : i32
    %29 = arith.extui %28 : i1 to i32
    %c0_i32_14 = arith.constant 0 : i32
    %30 = arith.cmpi ne, %29, %c0_i32_14 : i32
    scf.if %30 {
      %c0_15 = arith.constant 0 : index
      %c0_16 = arith.constant 0 : index
      %31 = vector.load %arg5[%c0_15, %c0_16] : memref<144x1xf32, #tpu.memory_space<vmem>>, vector<144x1xf32>
      %32 = vector.shape_cast %31 : vector<144x1xf32> to vector<1x144x1xf32>
      %cst_17 = arith.constant dense<0.000000e+00> : vector<1xf32>
      %33 = vector.multi_reduction <add>, %32, %cst_17 [1, 2] : vector<1x144x1xf32> to vector<1xf32>
      %34 = vector.shape_cast %33 : vector<1xf32> to vector<1x1x1xf32>
      %35 = vector.extract %34[0, 0, 0] : f32 from vector<1x1x1xf32>
      %36 = vector.broadcast %35 : f32 to vector<1x1x1xf32>
      %c0_18 = arith.constant 0 : index
      %c0_19 = arith.constant 0 : index
      %c0_20 = arith.constant 0 : index
      %37 = vector.load %arg4[%c0_18, %c0_19, %c0_20] : memref<1x1x1xf32, #tpu.memory_space<vmem>>, vector<1x1x1xf32>
      tpu.vector_store %arg4[%c0_18, %c0_19, %c0_20], %36 {strides = array<i32>} : memref<1x1x1xf32, #tpu.memory_space<vmem>>, vector<1x1x1xf32>,
    } else {
    }
    return
  }
  func.func @transform_0(%arg0: i32, %arg1: i32) -> (i32, i32) {
    %c1_i32 = arith.constant 1 : i32
    %0 = arith.muli %arg0, %c1_i32 : i32
    %1 = arith.addi %0, %arg1 : i32
    %c0_i32 = arith.constant 0 : i32
    %c0_i32_0 = arith.constant 0 : i32
    return %1, %c0_i32 : i32, i32
  }
  func.func @transform_1(%arg0: i32, %arg1: i32) -> (i32, i32) {
    %c1_i32 = arith.constant 1 : i32
    %0 = arith.muli %arg0, %c1_i32 : i32
    %1 = arith.addi %0, %arg1 : i32
    %c0_i32 = arith.constant 0 : i32
    %c0_i32_0 = arith.constant 0 : i32
    return %1, %c0_i32 : i32, i32
  }
  func.func @transform_2(%arg0: i32, %arg1: i32) -> (i32, i32, i32) {
    %c0_i32 = arith.constant 0 : i32
    %c0_i32_0 = arith.constant 0 : i32
    %c0_i32_1 = arith.constant 0 : i32
    return %arg0, %c0_i32, %c0_i32_0 : i32, i32, i32
  }
}

</mosaic_0001>

<llo_original>
// kernel: tpu_custom_call.1
$region0: #{tpu_custom_call.1}
  #allocation0 [shape = 'u32[]', space=smem, size = 0x4, offset = 0x4, fixed_abs, tag = 'smem constant byte address 0x4 - core index']
  #allocation1 [shape = 'u32[72,128]{1,0:T(1,128)}', space=vmem, size = 0x9000, scoped, tag = 'internal scratch']
  #allocation2 [shape = 'f32[144,1]{1,0:T(8,128)}', space=vmem, size = 0x12000, scoped, tag = 'scratch operand']
  %s0 = inlined_call_operand.vmem [shape: f32[144,32], index: 0, kind: input, shape index: {}]
  %s1 = inlined_call_operand.vmem [shape: s32[144,1], index: 1, kind: input, shape index: {}]
  %s2 = inlined_call_operand.hbm [shape: f32[1,1,1], index: 2, kind: output, shape index: {}]
  %s3 = sld [smem:[#allocation0]]
  $region26: #{tpu_custom_call.1} parent=0
    _
  %s5 = ssub.s32 1, %s3
  %s6 = scalar_select 0, %s5, %s3
  $region1: #{tpu_custom_call.1} parent=0
    #allocation3 [shape = 'u8[512]{0}', space=vmem, size = 0x400, scoped, tag = 'output window, operand 0, single buffered']
    #allocation4 [shape = 's32[1]{0}', space=sflag, size = 0x4, scoped, tag = 'scoped memory for tpu_custom_call.1']
    %7 = vsyncpa [#allocation4], 0
    // Predicated region
    $region2: #{tpu_custom_call.1} parent=1 // pred_check
      _
    $region3: #{tpu_custom_call.1} parent=1 // pred_check_branch
      %9 = sbr.rel (0) target = $region5
    $region4: #{tpu_custom_call.1} parent=1 // pred_region
      %s10 = sadd.s32 0, 0
      %s11 = smul.u32 18, %s10
      %p12 = scmp.lt.s32.totalorder %s11, 17
      %s13 = scalar_select %p12, %s11, 17
      %s14 = smul.addr %s13, 8
      %s15 = scalar_lea.vmem %s0, %s14
      %s16 = sadd.s32 0, 0
      %s17 = smul.u32 18, %s16
    $region5: #{tpu_custom_call.1} parent=1 // pred_fallthru
      _
    // Predicated region
    $region6: #{tpu_custom_call.1} parent=1 // pred_check
      _
    $region7: #{tpu_custom_call.1} parent=1 // pred_check_branch
      %19 = sbr.rel (0) target = $region9
    $region8: #{tpu_custom_call.1} parent=1 // pred_region
      %s20 = sadd.s32 0, 0
      %s21 = smul.u32 18, %s20
      %p22 = scmp.lt.s32.totalorder %s21, 17
      %s23 = scalar_select %p22, %s21, 17
      %s24 = smul.addr %s23, 8
      %s25 = scalar_lea.vmem %s1, %s24
      %s26 = sadd.s32 0, 0
      %s27 = smul.u32 18, %s26
    $region9: #{tpu_custom_call.1} parent=1 // pred_fallthru
      _
    %s28 = sadd.s32 0, 0
    %s29 = smul.u32 18, %s28
    %p30 = scmp.lt.s32.totalorder %s29, 17
    %s31 = scalar_select %p30, %s29, 17
    %s32 = smul.addr %s31, 8
    %s33 = scalar_lea.vmem %s0, %s32
    %s34 = sadd.s32 0, 0
    %s35 = smul.u32 18, %s34
    %p36 = scmp.lt.s32.totalorder %s35, 17
    %s37 = scalar_select %p36, %s35, 17
    %s38 = smul.addr %s37, 8
    %s39 = scalar_lea.vmem %s1, %s38
    %s40 = sadd.s32 0, 0
    %s41 = smul.u32 18, %s40
    %p42 = scmp.lt.s32.totalorder %s41, 17
    %s43 = scalar_select %p42, %s41, 17
    %s44 = smul.addr %s43, 8
    %s45 = scalar_lea.vmem %s0, %s44
    %s46 = sadd.s32 0, 0
    %s47 = smul.u32 18, %s46
    %s48 = sadd.s32 0, 0
    %s49 = smul.u32 18, %s48
    %p50 = scmp.lt.s32.totalorder %s49, 17
    %s51 = scalar_select %p50, %s49, 17
    %s52 = smul.addr %s51, 8
    %s53 = scalar_lea.vmem %s1, %s52
    %s54 = sadd.s32 0, 0
    %s55 = smul.u32 18, %s54
    %p56 = scmp.eq.s32.totalorder 0, 0
    // Predicated region
    $region10: #{tpu_custom_call.1} parent=1 // pred_check
      %p57 = pneg %p56
    $region11: #{tpu_custom_call.1} parent=1 // pred_check_branch
      %59 = sbr.rel (%p57) target = $region13
    $region12: #{tpu_custom_call.1} parent=1 // pred_region
      %vm60 = vcmask 7168
      %61 = vst.msk [vmem:[#allocation2] sm:$0xff] %vm60, 0.0
      %62 = vst.msk [vmem:[#allocation2 + $0x8] sm:$0xff] %vm60, 0.0
      %63 = vst.msk [vmem:[#allocation2 + $0x10] sm:$0xff] %vm60, 0.0
      %64 = vst.msk [vmem:[#allocation2 + $0x18] sm:$0xff] %vm60, 0.0
      %65 = vst.msk [vmem:[#allocation2 + $0x20] sm:$0xff] %vm60, 0.0
      %66 = vst.msk [vmem:[#allocation2 + $0x28] sm:$0xff] %vm60, 0.0
      %67 = vst.msk [vmem:[#allocation2 + $0x30] sm:$0xff] %vm60, 0.0
      %68 = vst.msk [vmem:[#allocation2 + $0x38] sm:$0xff] %vm60, 0.0
      %69 = vst.msk [vmem:[#allocation2 + $0x40] sm:$0xff] %vm60, 0.0
      %70 = vst.msk [vmem:[#allocation2 + $0x48] sm:$0xff] %vm60, 0.0
      %71 = vst.msk [vmem:[#allocation2 + $0x50] sm:$0xff] %vm60, 0.0
      %72 = vst.msk [vmem:[#allocation2 + $0x58] sm:$0xff] %vm60, 0.0
      %73 = vst.msk [vmem:[#allocation2 + $0x60] sm:$0xff] %vm60, 0.0
      %74 = vst.msk [vmem:[#allocation2 + $0x68] sm:$0xff] %vm60, 0.0
      %75 = vst.msk [vmem:[#allocation2 + $0x70] sm:$0xff] %vm60, 0.0
      %76 = vst.msk [vmem:[#allocation2 + $0x78] sm:$0xff] %vm60, 0.0
      %77 = vst.msk [vmem:[#allocation2 + $0x80] sm:$0xff] %vm60, 0.0
      %78 = vst.msk [vmem:[#allocation2 + $0x88] sm:$0xff] %vm60, 0.0
    $region13: #{tpu_custom_call.1} parent=1 // pred_fallthru
      _
    %v79 = vld [vmem:[%s45] sm:$0xff]
    %v80 = vld [vmem:[%s45 + $0x8] sm:$0xff]
    %v81 = vld [vmem:[%s45 + $0x10] sm:$0xff]
    %v82 = vld [vmem:[%s45 + $0x18] sm:$0xff]
    %v83 = vld [vmem:[%s45 + $0x20] sm:$0xff]
    %v84 = vld [vmem:[%s45 + $0x28] sm:$0xff]
    %v85 = vld [vmem:[%s45 + $0x30] sm:$0xff]
    %v86 = vld [vmem:[%s45 + $0x38] sm:$0xff]
    %v87 = vld [vmem:[%s45 + $0x40] sm:$0xff]
    %v88 = vld [vmem:[%s45 + $0x48] sm:$0xff]
    %v89 = vld [vmem:[%s45 + $0x50] sm:$0xff]
    %v90 = vld [vmem:[%s45 + $0x58] sm:$0xff]
    %v91 = vld [vmem:[%s45 + $0x60] sm:$0xff]
    %v92 = vld [vmem:[%s45 + $0x68] sm:$0xff]
    %v93 = vld [vmem:[%s45 + $0x70] sm:$0xff]
    %v94 = vld [vmem:[%s45 + $0x78] sm:$0xff]
    %v95 = vld [vmem:[%s45 + $0x80] sm:$0xff]
    %v96 = vld [vmem:[%s45 + $0x88] sm:$0xff]
    %v97 = vld [vmem:[%s53] sm:$0xff]
    %v98 = vld [vmem:[%s53 + $0x8] sm:$0xff]
    %v99 = vld [vmem:[%s53 + $0x10] sm:$0xff]
    %v100 = vld [vmem:[%s53 + $0x18] sm:$0xff]
    %v101 = vld [vmem:[%s53 + $0x20] sm:$0xff]
    %v102 = vld [vmem:[%s53 + $0x28] sm:$0xff]
    %v103 = vld [vmem:[%s53 + $0x30] sm:$0xff]
    %v104 = vld [vmem:[%s53 + $0x38] sm:$0xff]
    %v105 = vld [vmem:[%s53 + $0x40] sm:$0xff]
    %v106 = vld [vmem:[%s53 + $0x48] sm:$0xff]
    %v107 = vld [vmem:[%s53 + $0x50] sm:$0xff]
    %v108 = vld [vmem:[%s53 + $0x58] sm:$0xff]
    %v109 = vld [vmem:[%s53 + $0x60] sm:$0xff]
    %v110 = vld [vmem:[%s53 + $0x68] sm:$0xff]
    %v111 = vld [vmem:[%s53 + $0x70] sm:$0xff]
    %v112 = vld [vmem:[%s53 + $0x78] sm:$0xff]
    %v113 = vld [vmem:[%s53 + $0x80] sm:$0xff]
    %v114 = vld [vmem:[%s53 + $0x88] sm:$0xff]
    %vm115 = vcmp.ge.s32.totalorder %v97, 0
    %vm116 = vcmp.ge.s32.totalorder %v98, 0
    %vm117 = vcmp.ge.s32.totalorder %v99, 0
    %vm118 = vcmp.ge.s32.totalorder %v100, 0
    %vm119 = vcmp.ge.s32.totalorder %v101, 0
    %vm120 = vcmp.ge.s32.totalorder %v102, 0
    %vm121 = vcmp.ge.s32.totalorder %v103, 0
    %vm122 = vcmp.ge.s32.totalorder %v104, 0
    %vm123 = vcmp.ge.s32.totalorder %v105, 0
    %vm124 = vcmp.ge.s32.totalorder %v106, 0
    %vm125 = vcmp.ge.s32.totalorder %v107, 0
    %vm126 = vcmp.ge.s32.totalorder %v108, 0
    %vm127 = vcmp.ge.s32.totalorder %v109, 0
    %vm128 = vcmp.ge.s32.totalorder %v110, 0
    %vm129 = vcmp.ge.s32.totalorder %v111, 0
    %vm130 = vcmp.ge.s32.totalorder %v112, 0
    %vm131 = vcmp.ge.s32.totalorder %v113, 0
    %vm132 = vcmp.ge.s32.totalorder %v114, 0
    %vm133 = vcmask 261120
    %v134 = vsel %vm133, %v79, -inf
    %135 = vmax.xlane.f32.xlu0 %v134
    %v136 = vpop.xlane.xlu0 %135
    %v137 = vsel %vm133, %v80, -inf
    %138 = vmax.xlane.f32.xlu0 %v137
    %v139 = vpop.xlane.xlu0 %138
    %v140 = vsel %vm133, %v81, -inf
    %141 = vmax.xlane.f32.xlu0 %v140
    %v142 = vpop.xlane.xlu0 %141
    %v143 = vsel %vm133, %v82, -inf
    %144 = vmax.xlane.f32.xlu0 %v143
    %v145 = vpop.xlane.xlu0 %144
    %v146 = vsel %vm133, %v83, -inf
    %147 = vmax.xlane.f32.xlu0 %v146
    %v148 = vpop.xlane.xlu0 %147
    %v149 = vsel %vm133, %v84, -inf
    %150 = vmax.xlane.f32.xlu0 %v149
    %v151 = vpop.xlane.xlu0 %150
    %v152 = vsel %vm133, %v85, -inf
    %153 = vmax.xlane.f32.xlu0 %v152
    %v154 = vpop.xlane.xlu0 %153
    %v155 = vsel %vm133, %v86, -inf
    %156 = vmax.xlane.f32.xlu0 %v155
    %v157 = vpop.xlane.xlu0 %156
    %v158 = vsel %vm133, %v87, -inf
    %159 = vmax.xlane.f32.xlu0 %v158
    %v160 = vpop.xlane.xlu0 %159
    %v161 = vsel %vm133, %v88, -inf
    %162 = vmax.xlane.f32.xlu0 %v161
    %v163 = vpop.xlane.xlu0 %162
    %v164 = vsel %vm133, %v89, -inf
    %165 = vmax.xlane.f32.xlu0 %v164
    %v166 = vpop.xlane.xlu0 %165
    %v167 = vsel %vm133, %v90, -inf
    %168 = vmax.xlane.f32.xlu0 %v167
    %v169 = vpop.xlane.xlu0 %168
    %v170 = vsel %vm133, %v91, -inf
    %171 = vmax.xlane.f32.xlu0 %v170
    %v172 = vpop.xlane.xlu0 %171
    %v173 = vsel %vm133, %v92, -inf
    %174 = vmax.xlane.f32.xlu0 %v173
    %v175 = vpop.xlane.xlu0 %174
    %v176 = vsel %vm133, %v93, -inf
    %177 = vmax.xlane.f32.xlu0 %v176
    %v178 = vpop.xlane.xlu0 %177
    %v179 = vsel %vm133, %v94, -inf
    %180 = vmax.xlane.f32.xlu0 %v179
    %v181 = vpop.xlane.xlu0 %180
    %v182 = vsel %vm133, %v95, -inf
    %183 = vmax.xlane.f32.xlu0 %v182
    %v184 = vpop.xlane.xlu0 %183
    %v185 = vsel %vm133, %v96, -inf
    %186 = vmax.xlane.f32.xlu0 %v185
    %v187 = vpop.xlane.xlu0 %186
    %v188 = vsub.f32 %v79, %v136
    %v189 = vsub.f32 %v80, %v139
    %v190 = vsub.f32 %v81, %v142
    %v191 = vsub.f32 %v82, %v145
    %v192 = vsub.f32 %v83, %v148
    %v193 = vsub.f32 %v84, %v151
    %v194 = vsub.f32 %v85, %v154
    %v195 = vsub.f32 %v86, %v157
    %v196 = vsub.f32 %v87, %v160
    %v197 = vsub.f32 %v88, %v163
    %v198 = vsub.f32 %v89, %v166
    %v199 = vsub.f32 %v90, %v169
    %v200 = vsub.f32 %v91, %v172
    %v201 = vsub.f32 %v92, %v175
    %v202 = vsub.f32 %v93, %v178
    %v203 = vsub.f32 %v94, %v181
    %v204 = vsub.f32 %v95, %v184
    %v205 = vsub.f32 %v96, %v187
    %v206 = vmul.f32 %v188, 1.442695
    %v207 = vpow.pop %v206
    %v208 = vmul.f32 %v189, 1.442695
    %v209 = vpow.pop %v208
    %v210 = vmul.f32 %v190, 1.442695
    %v211 = vpow.pop %v210
    %v212 = vmul.f32 %v191, 1.442695
    %v213 = vpow.pop %v212
    %v214 = vmul.f32 %v192, 1.442695
    %v215 = vpow.pop %v214
    %v216 = vmul.f32 %v193, 1.442695
    %v217 = vpow.pop %v216
    %v218 = vmul.f32 %v194, 1.442695
    %v219 = vpow.pop %v218
    %v220 = vmul.f32 %v195, 1.442695
    %v221 = vpow.pop %v220
    %v222 = vmul.f32 %v196, 1.442695
    %v223 = vpow.pop %v222
    %v224 = vmul.f32 %v197, 1.442695
    %v225 = vpow.pop %v224
    %v226 = vmul.f32 %v198, 1.442695
    %v227 = vpow.pop %v226
    %v228 = vmul.f32 %v199, 1.442695
    %v229 = vpow.pop %v228
    %v230 = vmul.f32 %v200, 1.442695
    %v231 = vpow.pop %v230
    %v232 = vmul.f32 %v201, 1.442695
    %v233 = vpow.pop %v232
    %v234 = vmul.f32 %v202, 1.442695
    %v235 = vpow.pop %v234
    %v236 = vmul.f32 %v203, 1.442695
    %v237 = vpow.pop %v236
    %v238 = vmul.f32 %v204, 1.442695
    %v239 = vpow.pop %v238
    %v240 = vmul.f32 %v205, 1.442695
    %v241 = vpow.pop %v240
    %v242 = vsel %vm133, %v207, 0.0
    %243 = vadd.xlane.f32.xlu0 %v242
    %v244 = vpop.xlane.xlu0 %243
    %v245 = vsel %vm133, %v209, 0.0
    %246 = vadd.xlane.f32.xlu0 %v245
    %v247 = vpop.xlane.xlu0 %246
    %v248 = vsel %vm133, %v211, 0.0
    %249 = vadd.xlane.f32.xlu0 %v248
    %v250 = vpop.xlane.xlu0 %249
    %v251 = vsel %vm133, %v213, 0.0
    %252 = vadd.xlane.f32.xlu0 %v251
    %v253 = vpop.xlane.xlu0 %252
    %v254 = vsel %vm133, %v215, 0.0
    %255 = vadd.xlane.f32.xlu0 %v254
    %v256 = vpop.xlane.xlu0 %255
    %v257 = vsel %vm133, %v217, 0.0
    %258 = vadd.xlane.f32.xlu0 %v257
    %v259 = vpop.xlane.xlu0 %258
    %v260 = vsel %vm133, %v219, 0.0
    %261 = vadd.xlane.f32.xlu0 %v260
    %v262 = vpop.xlane.xlu0 %261
    %v263 = vsel %vm133, %v221, 0.0
    %264 = vadd.xlane.f32.xlu0 %v263
    %v265 = vpop.xlane.xlu0 %264
    %v266 = vsel %vm133, %v223, 0.0
    %267 = vadd.xlane.f32.xlu0 %v266
    %v268 = vpop.xlane.xlu0 %267
    %v269 = vsel %vm133, %v225, 0.0
    %270 = vadd.xlane.f32.xlu0 %v269
    %v271 = vpop.xlane.xlu0 %270
    %v272 = vsel %vm133, %v227, 0.0
    %273 = vadd.xlane.f32.xlu0 %v272
    %v274 = vpop.xlane.xlu0 %273
    %v275 = vsel %vm133, %v229, 0.0
    %276 = vadd.xlane.f32.xlu0 %v275
    %v277 = vpop.xlane.xlu0 %276
    %v278 = vsel %vm133, %v231, 0.0
    %279 = vadd.xlane.f32.xlu0 %v278
    %v280 = vpop.xlane.xlu0 %279
    %v281 = vsel %vm133, %v233, 0.0
    %282 = vadd.xlane.f32.xlu0 %v281
    %v283 = vpop.xlane.xlu0 %282
    %v284 = vsel %vm133, %v235, 0.0
    %285 = vadd.xlane.f32.xlu0 %v284
    %v286 = vpop.xlane.xlu0 %285
    %v287 = vsel %vm133, %v237, 0.0
    %288 = vadd.xlane.f32.xlu0 %v287
    %v289 = vpop.xlane.xlu0 %288
    %v290 = vsel %vm133, %v239, 0.0
    %291 = vadd.xlane.f32.xlu0 %v290
    %v292 = vpop.xlane.xlu0 %291
    %v293 = vsel %vm133, %v241, 0.0
    %294 = vadd.xlane.f32.xlu0 %v293
    %v295 = vpop.xlane.xlu0 %294
    %v296 = vlog2.pop %v244
    %v297 = vmul.f32 %v296, 0.6931472
    %v298 = vlog2.pop %v247
    %v299 = vmul.f32 %v298, 0.6931472
    %v300 = vlog2.pop %v250
    %v301 = vmul.f32 %v300, 0.6931472
    %v302 = vlog2.pop %v253
    %v303 = vmul.f32 %v302, 0.6931472
    %v304 = vlog2.pop %v256
    %v305 = vmul.f32 %v304, 0.6931472
    %v306 = vlog2.pop %v259
    %v307 = vmul.f32 %v306, 0.6931472
    %v308 = vlog2.pop %v262
    %v309 = vmul.f32 %v308, 0.6931472
    %v310 = vlog2.pop %v265
    %v311 = vmul.f32 %v310, 0.6931472
    %v312 = vlog2.pop %v268
    %v313 = vmul.f32 %v312, 0.6931472
    %v314 = vlog2.pop %v271
    %v315 = vmul.f32 %v314, 0.6931472
    %v316 = vlog2.pop %v274
    %v317 = vmul.f32 %v316, 0.6931472
    %v318 = vlog2.pop %v277
    %v319 = vmul.f32 %v318, 0.6931472
    %v320 = vlog2.pop %v280
    %v321 = vmul.f32 %v320, 0.6931472
    %v322 = vlog2.pop %v283
    %v323 = vmul.f32 %v322, 0.6931472
    %v324 = vlog2.pop %v286
    %v325 = vmul.f32 %v324, 0.6931472
    %v326 = vlog2.pop %v289
    %v327 = vmul.f32 %v326, 0.6931472
    %v328 = vlog2.pop %v292
    %v329 = vmul.f32 %v328, 0.6931472
    %v330 = vlog2.pop %v295
    %v331 = vmul.f32 %v330, 0.6931472
    %v332 = vlaneseq
    %v333 = vand.u32 %v332, 127
    %334 = vset.pattern.permute.xlu0 0
    %335 = vperm.xlu0 %334, %v97
    %v336 = vpop.permute.xlu0 %335
    %337 = vset.pattern.permute.xlu0 0
    %338 = vperm.xlu0 %337, %v98
    %v339 = vpop.permute.xlu0 %338
    %340 = vset.pattern.permute.xlu0 0
    %341 = vperm.xlu0 %340, %v99
    %v342 = vpop.permute.xlu0 %341
    %343 = vset.pattern.permute.xlu0 0
    %344 = vperm.xlu0 %343, %v100
    %v345 = vpop.permute.xlu0 %344
    %346 = vset.pattern.permute.xlu0 0
    %347 = vperm.xlu0 %346, %v101
    %v348 = vpop.permute.xlu0 %347
    %349 = vset.pattern.permute.xlu0 0
    %350 = vperm.xlu0 %349, %v102
    %v351 = vpop.permute.xlu0 %350
    %352 = vset.pattern.permute.xlu0 0
    %353 = vperm.xlu0 %352, %v103
    %v354 = vpop.permute.xlu0 %353
    %355 = vset.pattern.permute.xlu0 0
    %356 = vperm.xlu0 %355, %v104
    %v357 = vpop.permute.xlu0 %356
    %358 = vset.pattern.permute.xlu0 0
    %359 = vperm.xlu0 %358, %v105
    %v360 = vpop.permute.xlu0 %359
    %361 = vset.pattern.permute.xlu0 0
    %362 = vperm.xlu0 %361, %v106
    %v363 = vpop.permute.xlu0 %362
    %364 = vset.pattern.permute.xlu0 0
    %365 = vperm.xlu0 %364, %v107
    %v366 = vpop.permute.xlu0 %365
    %367 = vset.pattern.permute.xlu0 0
    %368 = vperm.xlu0 %367, %v108
    %v369 = vpop.permute.xlu0 %368
    %370 = vset.pattern.permute.xlu0 0
    %371 = vperm.xlu0 %370, %v109
    %v372 = vpop.permute.xlu0 %371
    %373 = vset.pattern.permute.xlu0 0
    %374 = vperm.xlu0 %373, %v110
    %v375 = vpop.permute.xlu0 %374
    %376 = vset.pattern.permute.xlu0 0
    %377 = vperm.xlu0 %376, %v111
    %v378 = vpop.permute.xlu0 %377
    %379 = vset.pattern.permute.xlu0 0
    %380 = vperm.xlu0 %379, %v112
    %v381 = vpop.permute.xlu0 %380
    %382 = vset.pattern.permute.xlu0 0
    %383 = vperm.xlu0 %382, %v113
    %v384 = vpop.permute.xlu0 %383
    %385 = vset.pattern.permute.xlu0 0
    %386 = vperm.xlu0 %385, %v114
    %v387 = vpop.permute.xlu0 %386
    %vm388 = vcmp.eq.s32.totalorder %v333, %v336
    %vm389 = vcmp.eq.s32.totalorder %v333, %v339
    %vm390 = vcmp.eq.s32.totalorder %v333, %v342
    %vm391 = vcmp.eq.s32.totalorder %v333, %v345
    %vm392 = vcmp.eq.s32.totalorder %v333, %v348
    %vm393 = vcmp.eq.s32.totalorder %v333, %v351
    %vm394 = vcmp.eq.s32.totalorder %v333, %v354
    %vm395 = vcmp.eq.s32.totalorder %v333, %v357
    %vm396 = vcmp.eq.s32.totalorder %v333, %v360
    %vm397 = vcmp.eq.s32.totalorder %v333, %v363
    %vm398 = vcmp.eq.s32.totalorder %v333, %v366
    %vm399 = vcmp.eq.s32.totalorder %v333, %v369
    %vm400 = vcmp.eq.s32.totalorder %v333, %v372
    %vm401 = vcmp.eq.s32.totalorder %v333, %v375
    %vm402 = vcmp.eq.s32.totalorder %v333, %v378
    %vm403 = vcmp.eq.s32.totalorder %v333, %v381
    %vm404 = vcmp.eq.s32.totalorder %v333, %v384
    %vm405 = vcmp.eq.s32.totalorder %v333, %v387
    %v406 = vsel %vm388, %v188, 0.0
    %v407 = vsel %vm389, %v189, 0.0
    %v408 = vsel %vm390, %v190, 0.0
    %v409 = vsel %vm391, %v191, 0.0
    %v410 = vsel %vm392, %v192, 0.0
    %v411 = vsel %vm393, %v193, 0.0
    %v412 = vsel %vm394, %v194, 0.0
    %v413 = vsel %vm395, %v195, 0.0
    %v414 = vsel %vm396, %v196, 0.0
    %v415 = vsel %vm397, %v197, 0.0
    %v416 = vsel %vm398, %v198, 0.0
    %v417 = vsel %vm399, %v199, 0.0
    %v418 = vsel %vm400, %v200, 0.0
    %v419 = vsel %vm401, %v201, 0.0
    %v420 = vsel %vm402, %v202, 0.0
    %v421 = vsel %vm403, %v203, 0.0
    %v422 = vsel %vm404, %v204, 0.0
    %v423 = vsel %vm405, %v205, 0.0
    %v424 = vsel %vm133, %v406, 0.0
    %425 = vadd.xlane.f32.xlu0 %v424
    %v426 = vpop.xlane.xlu0 %425
    %v427 = vsel %vm133, %v407, 0.0
    %428 = vadd.xlane.f32.xlu0 %v427
    %v429 = vpop.xlane.xlu0 %428
    %v430 = vsel %vm133, %v408, 0.0
    %431 = vadd.xlane.f32.xlu0 %v430
    %v432 = vpop.xlane.xlu0 %431
    %v433 = vsel %vm133, %v409, 0.0
    %434 = vadd.xlane.f32.xlu0 %v433
    %v435 = vpop.xlane.xlu0 %434
    %v436 = vsel %vm133, %v410, 0.0
    %437 = vadd.xlane.f32.xlu0 %v436
    %v438 = vpop.xlane.xlu0 %437
    %v439 = vsel %vm133, %v411, 0.0
    %440 = vadd.xlane.f32.xlu0 %v439
    %v441 = vpop.xlane.xlu0 %440
    %v442 = vsel %vm133, %v412, 0.0
    %443 = vadd.xlane.f32.xlu0 %v442
    %v444 = vpop.xlane.xlu0 %443
    %v445 = vsel %vm133, %v413, 0.0
    %446 = vadd.xlane.f32.xlu0 %v445
    %v447 = vpop.xlane.xlu0 %446
    %v448 = vsel %vm133, %v414, 0.0
    %449 = vadd.xlane.f32.xlu0 %v448
    %v450 = vpop.xlane.xlu0 %449
    %v451 = vsel %vm133, %v415, 0.0
    %452 = vadd.xlane.f32.xlu0 %v451
    %v453 = vpop.xlane.xlu0 %452
    %v454 = vsel %vm133, %v416, 0.0
    %455 = vadd.xlane.f32.xlu0 %v454
    %v456 = vpop.xlane.xlu0 %455
    %v457 = vsel %vm133, %v417, 0.0
    %458 = vadd.xlane.f32.xlu0 %v457
    %v459 = vpop.xlane.xlu0 %458
    %v460 = vsel %vm133, %v418, 0.0
    %461 = vadd.xlane.f32.xlu0 %v460
    %v462 = vpop.xlane.xlu0 %461
    %v463 = vsel %vm133, %v419, 0.0
    %464 = vadd.xlane.f32.xlu0 %v463
    %v465 = vpop.xlane.xlu0 %464
    %v466 = vsel %vm133, %v420, 0.0
    %467 = vadd.xlane.f32.xlu0 %v466
    %v468 = vpop.xlane.xlu0 %467
    %v469 = vsel %vm133, %v421, 0.0
    %470 = vadd.xlane.f32.xlu0 %v469
    %v471 = vpop.xlane.xlu0 %470
    %v472 = vsel %vm133, %v422, 0.0
    %473 = vadd.xlane.f32.xlu0 %v472
    %v474 = vpop.xlane.xlu0 %473
    %v475 = vsel %vm133, %v423, 0.0
    %476 = vadd.xlane.f32.xlu0 %v475
    %v477 = vpop.xlane.xlu0 %476
    %v478 = vld [vmem:[#allocation2] sm:$0xff]
    %v479 = vld [vmem:[#allocation2 + $0x8] sm:$0xff]
    %v480 = vld [vmem:[#allocation2 + $0x10] sm:$0xff]
    %v481 = vld [vmem:[#allocation2 + $0x18] sm:$0xff]
    %v482 = vld [vmem:[#allocation2 + $0x20] sm:$0xff]
    %v483 = vld [vmem:[#allocation2 + $0x28] sm:$0xff]
    %v484 = vld [vmem:[#allocation2 + $0x30] sm:$0xff]
    %v485 = vld [vmem:[#allocation2 + $0x38] sm:$0xff]
    %v486 = vld [vmem:[#allocation2 + $0x40] sm:$0xff]
    %v487 = vld [vmem:[#allocation2 + $0x48] sm:$0xff]
    %v488 = vld [vmem:[#allocation2 + $0x50] sm:$0xff]
    %v489 = vld [vmem:[#allocation2 + $0x58] sm:$0xff]
    %v490 = vld [vmem:[#allocation2 + $0x60] sm:$0xff]
    %v491 = vld [vmem:[#allocation2 + $0x68] sm:$0xff]
    %v492 = vld [vmem:[#allocation2 + $0x70] sm:$0xff]
    %v493 = vld [vmem:[#allocation2 + $0x78] sm:$0xff]
    %v494 = vld [vmem:[#allocation2 + $0x80] sm:$0xff]
    %v495 = vld [vmem:[#allocation2 + $0x88] sm:$0xff]
    %v496 = vsub.f32 %v297, %v426
    %v497 = vsub.f32 %v299, %v429
    %v498 = vsub.f32 %v301, %v432
    %v499 = vsub.f32 %v303, %v435
    %v500 = vsub.f32 %v305, %v438
    %v501 = vsub.f32 %v307, %v441
    %v502 = vsub.f32 %v309, %v444
    %v503 = vsub.f32 %v311, %v447
    %v504 = vsub.f32 %v313, %v450
    %v505 = vsub.f32 %v315, %v453
    %v506 = vsub.f32 %v317, %v456
    %v507 = vsub.f32 %v319, %v459
    %v508 = vsub.f32 %v321, %v462
    %v509 = vsub.f32 %v323, %v465
    %v510 = vsub.f32 %v325, %v468
    %v511 = vsub.f32 %v327, %v471
    %v512 = vsub.f32 %v329, %v474
    %v513 = vsub.f32 %v331, %v477
    %v514 = vsel %vm115, %v496, 0.0
    %v515 = vsel %vm116, %v497, 0.0
    %v516 = vsel %vm117, %v498, 0.0
    %v517 = vsel %vm118, %v499, 0.0
    %v518 = vsel %vm119, %v500, 0.0
    %v519 = vsel %vm120, %v501, 0.0
    %v520 = vsel %vm121, %v502, 0.0
    %v521 = vsel %vm122, %v503, 0.0
    %v522 = vsel %vm123, %v504, 0.0
    %v523 = vsel %vm124, %v505, 0.0
    %v524 = vsel %vm125, %v506, 0.0
    %v525 = vsel %vm126, %v507, 0.0
    %v526 = vsel %vm127, %v508, 0.0
    %v527 = vsel %vm128, %v509, 0.0
    %v528 = vsel %vm129, %v510, 0.0
    %v529 = vsel %vm130, %v511, 0.0
    %v530 = vsel %vm131, %v512, 0.0
    %v531 = vsel %vm132, %v513, 0.0
    %v532 = vadd.f32 %v478, %v514
    %v533 = vadd.f32 %v479, %v515
    %v534 = vadd.f32 %v480, %v516
    %v535 = vadd.f32 %v481, %v517
    %v536 = vadd.f32 %v482, %v518
    %v537 = vadd.f32 %v483, %v519
    %v538 = vadd.f32 %v484, %v520
    %v539 = vadd.f32 %v485, %v521
    %v540 = vadd.f32 %v486, %v522
    %v541 = vadd.f32 %v487, %v523
    %v542 = vadd.f32 %v488, %v524
    %v543 = vadd.f32 %v489, %v525
    %v544 = vadd.f32 %v490, %v526
    %v545 = vadd.f32 %v491, %v527
    %v546 = vadd.f32 %v492, %v528
    %v547 = vadd.f32 %v493, %v529
    %v548 = vadd.f32 %v494, %v530
    %v549 = vadd.f32 %v495, %v531
    %vm550 = vcmask 7168
    %551 = vst.msk [vmem:[#allocation2] sm:$0xff] %vm550, %v532
    %552 = vst.msk [vmem:[#allocation2 + $0x8] sm:$0xff] %vm550, %v533
    %553 = vst.msk [vmem:[#allocation2 + $0x10] sm:$0xff] %vm550, %v534
    %554 = vst.msk [vmem:[#allocation2 + $0x18] sm:$0xff] %vm550, %v535
    %555 = vst.msk [vmem:[#allocation2 + $0x20] sm:$0xff] %vm550, %v536
    %556 = vst.msk [vmem:[#allocation2 + $0x28] sm:$0xff] %vm550, %v537
    %557 = vst.msk [vmem:[#allocation2 + $0x30] sm:$0xff] %vm550, %v538
    %558 = vst.msk [vmem:[#allocation2 + $0x38] sm:$0xff] %vm550, %v539
    %559 = vst.msk [vmem:[#allocation2 + $0x40] sm:$0xff] %vm550, %v540
    %560 = vst.msk [vmem:[#allocation2 + $0x48] sm:$0xff] %vm550, %v541
    %561 = vst.msk [vmem:[#allocation2 + $0x50] sm:$0xff] %vm550, %v542
    %562 = vst.msk [vmem:[#allocation2 + $0x58] sm:$0xff] %vm550, %v543
    %563 = vst.msk [vmem:[#allocation2 + $0x60] sm:$0xff] %vm550, %v544
    %564 = vst.msk [vmem:[#allocation2 + $0x68] sm:$0xff] %vm550, %v545
    %565 = vst.msk [vmem:[#allocation2 + $0x70] sm:$0xff] %vm550, %v546
    %566 = vst.msk [vmem:[#allocation2 + $0x78] sm:$0xff] %vm550, %v547
    %567 = vst.msk [vmem:[#allocation2 + $0x80] sm:$0xff] %vm550, %v548
    %568 = vst.msk [vmem:[#allocation2 + $0x88] sm:$0xff] %vm550, %v549
    // Predicated region
    $region14: #{tpu_custom_call.1} parent=1 // pred_check
      %p569 = pneg %p56
    $region15: #{tpu_custom_call.1} parent=1 // pred_check_branch
      %571 = sbr.rel (%p569) target = $region17
    $region16: #{tpu_custom_call.1} parent=1 // pred_region
      %v572 = vld [vmem:[#allocation2] sm:$0xff]
      %v573 = vld [vmem:[#allocation2 + $0x8] sm:$0xff]
      %v574 = vld [vmem:[#allocation2 + $0x10] sm:$0xff]
      %v575 = vld [vmem:[#allocation2 + $0x18] sm:$0xff]
      %v576 = vld [vmem:[#allocation2 + $0x20] sm:$0xff]
      %v577 = vld [vmem:[#allocation2 + $0x28] sm:$0xff]
      %v578 = vld [vmem:[#allocation2 + $0x30] sm:$0xff]
      %v579 = vld [vmem:[#allocation2 + $0x38] sm:$0xff]
      %v580 = vld [vmem:[#allocation2 + $0x40] sm:$0xff]
      %v581 = vld [vmem:[#allocation2 + $0x48] sm:$0xff]
      %v582 = vld [vmem:[#allocation2 + $0x50] sm:$0xff]
      %v583 = vld [vmem:[#allocation2 + $0x58] sm:$0xff]
      %v584 = vld [vmem:[#allocation2 + $0x60] sm:$0xff]
      %v585 = vld [vmem:[#allocation2 + $0x68] sm:$0xff]
      %v586 = vld [vmem:[#allocation2 + $0x70] sm:$0xff]
      %v587 = vld [vmem:[#allocation2 + $0x78] sm:$0xff]
      %v588 = vld [vmem:[#allocation2 + $0x80] sm:$0xff]
      %v589 = vld [vmem:[#allocation2 + $0x88] sm:$0xff]
      %v590 = vsel %vm550, %v572, 0.0
      %v591 = vsel %vm550, %v573, 0.0
      %v592 = vadd.f32 %v590, %v591
      %v593 = vsel %vm550, %v574, 0.0
      %v594 = vadd.f32 %v592, %v593
      %v595 = vsel %vm550, %v575, 0.0
      %v596 = vadd.f32 %v594, %v595
      %v597 = vsel %vm550, %v576, 0.0
      %v598 = vadd.f32 %v596, %v597
      %v599 = vsel %vm550, %v577, 0.0
      %v600 = vadd.f32 %v598, %v599
      %v601 = vsel %vm550, %v578, 0.0
      %v602 = vadd.f32 %v600, %v601
      %v603 = vsel %vm550, %v579, 0.0
      %v604 = vadd.f32 %v602, %v603
      %v605 = vsel %vm550, %v580, 0.0
      %v606 = vadd.f32 %v604, %v605
      %v607 = vsel %vm550, %v581, 0.0
      %v608 = vadd.f32 %v606, %v607
      %v609 = vsel %vm550, %v582, 0.0
      %v610 = vadd.f32 %v608, %v609
      %v611 = vsel %vm550, %v583, 0.0
      %v612 = vadd.f32 %v610, %v611
      %v613 = vsel %vm550, %v584, 0.0
      %v614 = vadd.f32 %v612, %v613
      %v615 = vsel %vm550, %v585, 0.0
      %v616 = vadd.f32 %v614, %v615
      %v617 = vsel %vm550, %v586, 0.0
      %v618 = vadd.f32 %v616, %v617
      %v619 = vsel %vm550, %v587, 0.0
      %v620 = vadd.f32 %v618, %v619
      %v621 = vsel %vm550, %v588, 0.0
      %v622 = vadd.f32 %v620, %v621
      %v623 = vsel %vm550, %v589, 0.0
      %v624 = vadd.f32 %v622, %v623
      %625 = vadd.xlane.f32.xlu0 %v624
      %v626 = vpop.xlane.xlu0 %625
      %v627 = vrot.slane %v626, 4
      %v628 = vadd.f32 %v626, %v627
      %v629 = vrot.slane %v628, 2
      %v630 = vadd.f32 %v628, %v629
      %v631 = vrot.slane %v630, 1
      %v632 = vadd.f32 %v630, %v631
      %s633 = vtos %v632
      %v634 = vstv %s633
      %vm635 = vcmask 0
      %636 = vst.msk [vmem:[#allocation3] sm:$0x1] %vm635, %v634
    $region17: #{tpu_custom_call.1} parent=1 // pred_fallthru
      _
    // Predicated region
    $region18: #{tpu_custom_call.1} parent=1 // pred_check
      _
    $region19: #{tpu_custom_call.1} parent=1 // pred_check_branch
      %638 = sbr.rel (0) target = $region21
    $region20: #{tpu_custom_call.1} parent=1 // pred_region
      %640 = vsyncadd [#allocation4], 0
      %s642 = sshll.u32 [#allocation3], 4
      %s643 = int_to_ptr.vmem [resolvable:$true] %s642
      %s644 = sshll.u32 %s2, 4
      %s645 = int_to_ptr.hbm [resolvable:$true] %s644
      %647 = dma.vmem_to_hbm [thread:$0]  %s643, 16, %s645, [#allocation4]
    $region21: #{tpu_custom_call.1} parent=1 // pred_fallthru
      _
    // Predicated region
    $region22: #{tpu_custom_call.1} parent=1 // pred_check
      _
    $region23: #{tpu_custom_call.1} parent=1 // pred_check_branch
      %649 = sbr.rel (0) target = $region25
    $region24: #{tpu_custom_call.1} parent=1 // pred_region
      %651 = dma.done [#allocation4], 16
    $region25: #{tpu_custom_call.1} parent=1 // pred_fallthru
      _
    %652 = vsyncpa [#allocation4], 1

</llo_original>
